<compile_context>
chip_gen: v5e
topology: v5e:2x2
jax: 0.10.0
libtpu: 0.0.40
codegen_flags: <defaults>
</compile_context>

<pallas_src>
import functools

import jax
import jax.numpy as jnp
from jax.experimental import pallas as pl
from jax.experimental.pallas import tpu as pltpu

_VMEM_LIMIT = 48 * 1024 * 1024  # safe on v5e/v6e (128 MiB) and v7x (64 MiB physical)


# ----------------------------- kernels ------------------------------------- #

def _fused_in_kernel(w_ref, x_ref, gb_ref, o_ref, *, eps, inv_count):
    """Single-tile path: conv matmul + InstanceNorm + affine + ReLU in one pass.

    w_ref: (Cout, KC) bf16, x_ref: (1, KC, P) bf16, gb_ref: (Cout, 2) f32,
    o_ref: (1, Cout, P) f32.  P is lane-dense.
    """
    y = jnp.dot(w_ref[...], x_ref[0], preferred_element_type=jnp.float32)  # (Cout, P)
    mean = jnp.sum(y, axis=-1, keepdims=True) * inv_count                  # (Cout, 1)
    var = jnp.sum(y * y, axis=-1, keepdims=True) * inv_count - mean * mean
    rstd = jax.lax.rsqrt(var + eps)
    g = gb_ref[:, 0:1]
    b = gb_ref[:, 1:2]
    o_ref[0] = jnp.maximum((y - mean) * (rstd * g) + b, 0.0).astype(o_ref.dtype)


def _conv_stats_kernel(w_ref, x_ref, y_ref, stats_ref, sum_ref, sq_ref,
                       *, eps, inv_count):
    """Tiled pass 1: y tile = W @ patches_tile; accumulate sum / sum-of-squares.

    Grid is (N, n_pt); the P-tile axis is the reduction ("arbitrary") axis.
    y_ref: (1, Cout, tp) raw conv output tile; stats_ref: (1, Cout, 2) [mean, rstd],
    written once at the last P-tile.  sum_ref / sq_ref: VMEM (Cout, 1) scratch.
    """
    pt = pl.program_id(1)
    y = jnp.dot(w_ref[...], x_ref[0], preferred_element_type=jnp.float32)  # (Cout, tp)
    y_ref[0] = y

    @pl.when(pt == 0)
    def _():
        sum_ref[...] = jnp.zeros_like(sum_ref)
        sq_ref[...] = jnp.zeros_like(sq_ref)

    sum_ref[...] += jnp.sum(y, axis=-1, keepdims=True)
    sq_ref[...] += jnp.sum(y * y, axis=-1, keepdims=True)

    @pl.when(pt == pl.num_programs(1) - 1)
    def _():
        mean = sum_ref[...] * inv_count
        var = sq_ref[...] * inv_count - mean * mean
        rstd = jax.lax.rsqrt(var + eps)
        stats_ref[0] = jnp.concatenate([mean, rstd], axis=1)   # (Cout, 2)


def _norm_affine_relu_kernel(y_ref, stats_ref, gb_ref, o_ref):
    """Tiled pass 2: (y - mean) * rstd * gamma + beta, ReLU. Lane-dense stores."""
    y = y_ref[0]                       # (Cout, tp)
    s = stats_ref[0]                   # (Cout, 2)
    mean = s[:, 0:1]
    rstd = s[:, 1:2]
    g = gb_ref[:, 0:1]
    b = gb_ref[:, 1:2]
    o_ref[0] = jnp.maximum((y - mean) * (rstd * g) + b, 0.0).astype(o_ref.dtype)


def _conv_bias_tanh_kernel(w_ref, x_ref, b_ref, o_ref):
    """'hidden_output' branch: conv matmul + bias + tanh, per P-tile."""
    y = jnp.dot(w_ref[...], x_ref[0], preferred_element_type=jnp.float32)  # (Cout, tp)
    o_ref[0] = jnp.tanh(y + b_ref[...]).astype(o_ref.dtype)


# ----------------------------- wrapper glue --------------------------------- #

def _im2col_t(x_nchw, ksize, stride, pad):
    """im2col directly in transposed layout: (N, KC, P) with P = Ho*Wo lane-dense.

    KC element ordering is (ki, kj, cin), matching weight.transpose(0,2,3,1).reshape.
    """
    N, C, H, W = x_nchw.shape
    xp = jnp.pad(x_nchw, ((0, 0), (0, 0), (pad, pad), (pad, pad)))
    Ho = (H + 2 * pad - ksize) // stride + 1
    Wo = (W + 2 * pad - ksize) // stride + 1
    taps = []
    for ki in range(ksize):
        for kj in range(ksize):
            taps.append(xp[:, :, ki:ki + stride * Ho:stride,
                           kj:kj + stride * Wo:stride])        # (N, C, Ho, Wo)
    patches = jnp.stack(taps, axis=1)                          # (N, K*K, C, Ho, Wo)
    return patches.reshape(N, ksize * ksize * C, Ho * Wo), Ho, Wo


def _choose_tile_p(P, KC, max_tile_p):
    """Pick the P-tile so a bf16 (KC, tp) patch tile double-buffers comfortably."""
    budget = 8 * 1024 * 1024                       # bytes per single patch buffer
    cap = budget // max(2 * KC, 1)                 # bf16 = 2 bytes/elem
    cap = min(cap, max_tile_p)
    cap = max(128, (cap // 128) * 128)             # keep last dim 128-aligned
    if P <= cap:
        return P, P                                # single tile, no padding
    p_pad = ((P + cap - 1) // cap) * cap
    return cap, p_pad


def gen_conv_forward(x_nchw, weight, bias, gamma, beta,
                     layer_type='input_hidden', eps=1e-5,
                     compute_dtype=jnp.bfloat16, max_tile_p=1024):
    """GenConv forward. x_nchw: (N, Cin, H, W); weight: (Cout, Cin, 4, 4)."""
    ksize, stride, pad = 4, 2, 1
    N, Cin, H, W = x_nchw.shape
    Cout = weight.shape[0]
    KC = ksize * ksize * Cin

    patches_t, Ho, Wo = _im2col_t(x_nchw, ksize, stride, pad)   # (N, KC, P) f32
    P = Ho * Wo
    tp, p_pad = _choose_tile_p(P, KC, max_tile_p)
    if p_pad != P:
        # Zero padding along P: contributes 0 to sum/sumsq, so stats (divided by the
        # true P) stay exact; padded columns are sliced off below.
        patches_t = jnp.pad(patches_t, ((0, 0), (0, 0), (0, p_pad - P)))
    patches_t = patches_t.astype(compute_dtype)
    n_pt = p_pad // tp

    # (Cout, KC) weight with (ki, kj, cin) ordering to match patches_t.
    w_t = jnp.transpose(weight, (0, 2, 3, 1)).reshape(Cout, KC).astype(compute_dtype)
    inv_count = 1.0 / float(P)

    if layer_type == 'input_hidden':
        # Conv bias is a per-channel constant and cancels under InstanceNorm -> dropped.
        gb = jnp.stack([gamma, beta], axis=1).astype(jnp.float32)   # (Cout, 2)

        if n_pt == 1:
            kernel = functools.partial(_fused_in_kernel, eps=eps, inv_count=inv_count)
            out = pl.pallas_call(
                kernel,
                out_shape=jax.ShapeDtypeStruct((N, Cout, p_pad), jnp.float32),
                grid_spec=pltpu.PrefetchScalarGridSpec(
                    num_scalar_prefetch=0,
                    grid=(N,),
                    in_specs=[
                        pl.BlockSpec((Cout, KC), lambda n: (0, 0)),
                        pl.BlockSpec((1, KC, p_pad), lambda n: (n, 0, 0)),
                        pl.BlockSpec((Cout, 2), lambda n: (0, 0)),
                    ],
                    out_specs=pl.BlockSpec((1, Cout, p_pad), lambda n: (n, 0, 0)),
                ),
                compiler_params=pltpu.CompilerParams(
                    dimension_semantics=("parallel",),
                    vmem_limit_bytes=_VMEM_LIMIT),
            )(w_t, patches_t, gb)
        else:
            conv_kernel = functools.partial(_conv_stats_kernel,
                                            eps=eps, inv_count=inv_count)
            y_raw, stats = pl.pallas_call(
                conv_kernel,
                out_shape=(jax.ShapeDtypeStruct((N, Cout, p_pad), jnp.float32),
                           jax.ShapeDtypeStruct((N, Cout, 2), jnp.float32)),
                grid_spec=pltpu.PrefetchScalarGridSpec(
                    num_scalar_prefetch=0,
                    grid=(N, n_pt),
                    in_specs=[
                        pl.BlockSpec((Cout, KC), lambda n, p: (0, 0)),
                        pl.BlockSpec((1, KC, tp), lambda n, p: (n, 0, p)),
                    ],
                    out_specs=(
                        pl.BlockSpec((1, Cout, tp), lambda n, p: (n, 0, p)),
                        pl.BlockSpec((1, Cout, 2), lambda n, p: (n, 0, 0)),
                    ),
                    scratch_shapes=[pltpu.VMEM((Cout, 1), jnp.float32),
                                    pltpu.VMEM((Cout, 1), jnp.float32)],
                ),
                compiler_params=pltpu.CompilerParams(
                    dimension_semantics=("parallel", "arbitrary"),
                    vmem_limit_bytes=_VMEM_LIMIT),
            )(w_t, patches_t)

            out = pl.pallas_call(
                _norm_affine_relu_kernel,
                out_shape=jax.ShapeDtypeStruct((N, Cout, p_pad), jnp.float32),
                grid_spec=pltpu.PrefetchScalarGridSpec(
                    num_scalar_prefetch=0,
                    grid=(N, n_pt),
                    in_specs=[
                        pl.BlockSpec((1, Cout, tp), lambda n, p: (n, 0, p)),
                        pl.BlockSpec((1, Cout, 2), lambda n, p: (n, 0, 0)),
                        pl.BlockSpec((Cout, 2), lambda n, p: (0, 0)),
                    ],
                    out_specs=pl.BlockSpec((1, Cout, tp), lambda n, p: (n, 0, p)),
                ),
                compiler_params=pltpu.CompilerParams(
                    dimension_semantics=("parallel", "parallel"),
                    vmem_limit_bytes=_VMEM_LIMIT),
            )(y_raw, stats, gb)
    else:
        b2 = bias.reshape(Cout, 1).astype(jnp.float32)
        out = pl.pallas_call(
            _conv_bias_tanh_kernel,
            out_shape=jax.ShapeDtypeStruct((N, Cout, p_pad), jnp.float32),
            grid_spec=pltpu.PrefetchScalarGridSpec(
                num_scalar_prefetch=0,
                grid=(N, n_pt),
                in_specs=[
                    pl.BlockSpec((Cout, KC), lambda n, p: (0, 0)),
                    pl.BlockSpec((1, KC, tp), lambda n, p: (n, 0, p)),
                    pl.BlockSpec((Cout, 1), lambda n, p: (0, 0)),
                ],
                out_specs=pl.BlockSpec((1, Cout, tp), lambda n, p: (n, 0, p)),
            ),
            compiler_params=pltpu.CompilerParams(
                dimension_semantics=("parallel", "parallel"),
                vmem_limit_bytes=_VMEM_LIMIT),
        )(w_t, patches_t, b2)

    if p_pad != P:
        out = out[:, :, :P]
    # (N, Cout, P) is already channel-major: pure reshape to NCHW, no transpose.
    return out.reshape(N, Cout, Ho, Wo)


# ----------------------------- reference & test ----------------------------- #

def _reference(x, weight, bias, gamma, beta, layer_type='input_hidden',
               eps=1e-5, compute_dtype=jnp.bfloat16):
    y = jax.lax.conv_general_dilated(
        x.astype(compute_dtype), weight.astype(compute_dtype),
        window_strides=(2, 2), padding=((1, 1), (1, 1)),
        dimension_numbers=('NCHW', 'OIHW', 'NCHW'),
        preferred_element_type=jnp.float32)
    y = y + bias.reshape(1, -1, 1, 1).astype(jnp.float32)
    if layer_type == 'input_hidden':
        mean = jnp.mean(y, axis=(2, 3), keepdims=True)
        var = jnp.mean((y - mean) ** 2, axis=(2, 3), keepdims=True)
        y = (y - mean) * jax.lax.rsqrt(var + eps)
        y = y * gamma.reshape(1, -1, 1, 1) + beta.reshape(1, -1, 1, 1)
        y = jnp.maximum(y, 0.0)
    else:
        y = jnp.tanh(y)
    return y


if __name__ == "__main__":
    key = jax.random.PRNGKey(0)
    k_x, k_w, k_b, k_g, k_be, k_x2 = jax.random.split(key, 6)

    N, Cin, H, W = 2, 4, 16, 16
    Cout, K = 8, 4

    x = jax.random.normal(k_x, (N, Cin, H, W), dtype=jnp.float32)
    weight = jax.random.normal(k_w, (Cout, Cin, K, K), dtype=jnp.float32) * 0.1
    bias = jax.random.normal(k_b, (Cout,), dtype=jnp.float32) * 0.1
    gamma = 1.0 + 0.1 * jax.random.normal(k_g, (Cout,), dtype=jnp.float32)
    beta = 0.1 * jax.random.normal(k_be, (Cout,), dtype=jnp.float32)

    # Path 1: fused single-tile kernel (P = 64 fits one tile).
    out = gen_conv_forward(x, weight, bias, gamma, beta, layer_type='input_hidden')
    out = jax.block_until_ready(out)
    ref = _reference(x, weight, bias, gamma, beta, layer_type='input_hidden')
    assert out.shape == (N, Cout, H // 2, W // 2), out.shape
    assert jnp.allclose(out, ref, atol=2e-3, rtol=2e-3), \
        float(jnp.max(jnp.abs(out - ref)))

    # Path 2: tiled P-axis path (conv+stats kernel, then normalize kernel),
    # forced by a small max_tile_p at H=W=32 (P=256, two 128-wide tiles).
    x2 = jax.random.normal(k_x2, (N, Cin, 32, 32), dtype=jnp.float32)
    out2 = gen_conv_forward(x2, weight, bias, gamma, beta,
                            layer_type='input_hidden', max_tile_p=128)
    out2 = jax.block_until_ready(out2)
    ref2 = _reference(x2, weight, bias, gamma, beta, layer_type='input_hidden')
    assert out2.shape == (N, Cout, 16, 16), out2.shape
    assert jnp.allclose(out2, ref2, atol=2e-3, rtol=2e-3), \
        float(jnp.max(jnp.abs(out2 - ref2)))

    # Path 3: 'hidden_output' branch (conv + bias + tanh).
    out3 = gen_conv_forward(x, weight, bias, gamma, beta, layer_type='hidden_output')
    out3 = jax.block_until_ready(out3)
    ref3 = _reference(x, weight, bias, gamma, beta, layer_type='hidden_output')
    assert jnp.allclose(out3, ref3, atol=2e-3, rtol=2e-3), \
        float(jnp.max(jnp.abs(out3 - ref3)))

    print("KERNEL_OK")
</pallas_src>

<mosaic_0001>
module attributes {stable_mosaic.version = 11 : i64} {
  func.func @_fused_in_kernel(%arg0: i32, %arg1: memref<8x64xbf16, #tpu.memory_space<vmem>>, %arg2: memref<1x64x64xbf16, #tpu.memory_space<vmem>>, %arg3: memref<8x2xf32, #tpu.memory_space<vmem>>, %arg4: memref<1x8x64xf32, #tpu.memory_space<vmem>>) attributes {dimension_semantics = [#tpu.dimension_semantics<parallel>], iteration_bounds = array<i64: 2>, scalar_prefetch = 0 : i64, scratch_operands = 0 : i64, tpu.core_type = #tpu.core_type<tc>, window_params = [{pipeline_mode = #tpu.pipeline_mode<synchronous>, transform_indices = @transform_0, window_bounds = array<i64: 8, 64>}, {transform_indices = @transform_1, window_bounds = array<i64: 1, 64, 64>}, {pipeline_mode = #tpu.pipeline_mode<synchronous>, transform_indices = @transform_2, window_bounds = array<i64: 8, 2>}, {transform_indices = @transform_3, window_bounds = array<i64: 1, 8, 64>}]} {
    %c0 = arith.constant 0 : index
    %c0_0 = arith.constant 0 : index
    %0 = vector.load %arg1[%c0, %c0_0] : memref<8x64xbf16, #tpu.memory_space<vmem>>, vector<8x64xbf16>
    %c0_1 = arith.constant 0 : index
    %c0_2 = arith.constant 0 : index
    %c0_3 = arith.constant 0 : index
    %1 = vector.load %arg2[%c0_1, %c0_2, %c0_3] : memref<1x64x64xbf16, #tpu.memory_space<vmem>>, vector<1x64x64xbf16>
    %2 = vector.shape_cast %1 : vector<1x64x64xbf16> to vector<64x64xbf16>
    %cst = arith.constant dense<0.000000e+00> : vector<8x64xf32>
    %3 = tpu.matmul %0, %2, %cst {dimension_numbers = #tpu.dot_dimension_numbers<[1], [0], [0], [1], [0, 0, 1, 1], [], []>} : vector<8x64xbf16>, vector<64x64xbf16>, vector<8x64xf32> -> vector<8x64xf32>
    %cst_4 = arith.constant dense<0.000000e+00> : vector<8xf32>
    %4 = vector.multi_reduction <add>, %3, %cst_4 [1] : vector<8x64xf32> to vector<8xf32>
    %5 = vector.shape_cast %4 : vector<8xf32> to vector<8x1xf32>
    %cst_5 = arith.constant 1.562500e-02 : f32
    %6 = vector.broadcast %cst_5 : f32 to vector<8x1xf32>
    %7 = arith.mulf %5, %6 : vector<8x1xf32>
    %8 = arith.mulf %3, %3 : vector<8x64xf32>
    %cst_6 = arith.constant dense<0.000000e+00> : vector<8xf32>
    %9 = vector.multi_reduction <add>, %8, %cst_6 [1] : vector<8x64xf32> to vector<8xf32>
    %10 = vector.shape_cast %9 : vector<8xf32> to vector<8x1xf32>
    %cst_7 = arith.constant 1.562500e-02 : f32
    %11 = vector.broadcast %cst_7 : f32 to vector<8x1xf32>
    %12 = arith.mulf %10, %11 : vector<8x1xf32>
    %13 = arith.mulf %7, %7 : vector<8x1xf32>
    %14 = arith.subf %12, %13 : vector<8x1xf32>
    %cst_8 = arith.constant 9.99999974E-6 : f32
    %15 = vector.broadcast %cst_8 : f32 to vector<8x1xf32>
    %16 = arith.addf %14, %15 : vector<8x1xf32>
    %17 = math.rsqrt %16 : vector<8x1xf32>
    %c0_9 = arith.constant 0 : index
    %c0_10 = arith.constant 0 : index
    %18 = vector.load %arg3[%c0_9, %c0_10] : memref<8x2xf32, #tpu.memory_space<vmem>>, vector<8x1xf32>
    %c0_11 = arith.constant 0 : index
    %c1 = arith.constant 1 : index
    %19 = vector.load %arg3[%c0_11, %c1] : memref<8x2xf32, #tpu.memory_space<vmem>>, vector<8x1xf32>
    %20 = vector.broadcast %7 : vector<8x1xf32> to vector<8x64xf32>
    %21 = arith.subf %3, %20 : vector<8x64xf32>
    %22 = arith.mulf %17, %18 : vector<8x1xf32>
    %23 = vector.broadcast %22 : vector<8x1xf32> to vector<8x64xf32>
    %24 = arith.mulf %21, %23 : vector<8x64xf32>
    %25 = vector.broadcast %19 : vector<8x1xf32> to vector<8x64xf32>
    %26 = arith.addf %24, %25 : vector<8x64xf32>
    %cst_12 = arith.constant 0.000000e+00 : f32
    %27 = vector.broadcast %cst_12 : f32 to vector<8x64xf32>
    %28 = arith.maximumf %26, %27 : vector<8x64xf32>
    %c0_13 = arith.constant 0 : index
    %c0_14 = arith.constant 0 : index
    %c0_15 = arith.constant 0 : index
    %29 = vector.load %arg4[%c0_13, %c0_14, %c0_15] : memref<1x8x64xf32, #tpu.memory_space<vmem>>, vector<1x8x64xf32>
    %30 = vector.shape_cast %29 : vector<1x8x64xf32> to vector<8x64xf32>
    %31 = vector.shape_cast %28 : vector<8x64xf32> to vector<1x8x64xf32>
    tpu.vector_store %arg4[%c0_13, %c0_14, %c0_15], %31 {strides = array<i32>} : memref<1x8x64xf32, #tpu.memory_space<vmem>>, vector<1x8x64xf32>,
    return
  }
  func.func @transform_0(%arg0: i32) -> (i32, i32) {
    %c0_i32 = arith.constant 0 : i32
    %c0_i32_0 = arith.constant 0 : i32
    %c0_i32_1 = arith.constant 0 : i32
    return %c0_i32, %c0_i32_0 : i32, i32
  }
  func.func @transform_1(%arg0: i32) -> (i32, i32, i32) {
    %c0_i32 = arith.constant 0 : i32
    %c0_i32_0 = arith.constant 0 : i32
    %c0_i32_1 = arith.constant 0 : i32
    return %arg0, %c0_i32, %c0_i32_0 : i32, i32, i32
  }
  func.func @transform_2(%arg0: i32) -> (i32, i32) {
    %c0_i32 = arith.constant 0 : i32
    %c0_i32_0 = arith.constant 0 : i32
    %c0_i32_1 = arith.constant 0 : i32
    return %c0_i32, %c0_i32_0 : i32, i32
  }
  func.func @transform_3(%arg0: i32) -> (i32, i32, i32) {
    %c0_i32 = arith.constant 0 : i32
    %c0_i32_0 = arith.constant 0 : i32
    %c0_i32_1 = arith.constant 0 : i32
    return %arg0, %c0_i32, %c0_i32_0 : i32, i32, i32
  }
}

</mosaic_0001>

<llo_original>
// kernel: tpu_custom_call.1
$region0: #{tpu_custom_call.1}
  #allocation0 [shape = 'u32[]', space=smem, size = 0x4, offset = 0x4, fixed_abs, tag = 'smem constant byte address 0x4 - core index']
  #allocation1 [shape = 'u32[72,128]{1,0:T(1,128)}', space=vmem, size = 0x9000, scoped, tag = 'internal scratch']
  %s0 = inlined_call_operand.vmem [shape: bf16[8,64], index: 0, kind: input, shape index: {}]
  %s1 = inlined_call_operand.hbm [shape: bf16[2,64,64], index: 1, kind: input, shape index: {}]
  %s2 = inlined_call_operand.vmem [shape: f32[8,2], index: 2, kind: input, shape index: {}]
  %s3 = inlined_call_operand.hbm [shape: f32[2,8,64], index: 3, kind: output, shape index: {}]
  %s4 = sld [smem:[#allocation0]]
  $region49: #{tpu_custom_call.1} parent=0
    _
  %s6 = ssub.s32 1, %s4
  %s7 = scalar_select 0, %s6, %s4
  $region1: #{tpu_custom_call.1} parent=0
    #allocation2 [shape = 'u8[32768]{0}', space=vmem, size = 0x8000, scoped, tag = 'input window, operand 1']
    #allocation3 [shape = 's32[2]{0}', space=sflag, size = 0x8, scoped, tag = 'scoped memory for tpu_custom_call.1']
    #allocation4 [shape = 's32[2]{0}', space=sflag, size = 0x8, scoped, tag = 'scoped memory for tpu_custom_call.1']
    #allocation5 [shape = 'u8[8192]{0}', space=vmem, size = 0x2000, scoped, tag = 'output window, operand 0']
    %8 = vsyncpa [#allocation3], 0
    %s9 = scalar_lea.sflag [#allocation3], 1
    %10 = vsyncpa %s9, 0
    %11 = vsyncpa [#allocation4], 0
    %s12 = scalar_lea.sflag [#allocation4], 1
    %13 = vsyncpa %s12, 0
    loop: start=0, step=1, limit=4
    $region2: #{tpu_custom_call.1} parent=1 // loop_pre_header
      _
    $region3: #{tpu_custom_call.1} parent=1 // loop_header
      %s15 = sphi 0, %s19
      %p16 = scmp.ge.s32.totalorder %s15, 4
      %s23 = sphi 0, %s23
      %s25 = sphi 0, %s23
      %s26 = sphi 0, %s25
      %s40 = sphi 0, %s26
      %s46 = sphi 0, %s48
      %s49 = sphi 0, %s46
      %s50 = sphi 0, %s49
      %s66 = sphi 0, %s50
      %s70 = sphi 0, %s70
      %s72 = sphi 0, %s70
      %s73 = sphi 0, %s72
      %s87 = sphi 0, %s73
      %s93 = sphi 0, %s95
      %s96 = sphi 0, %s93
      %s97 = sphi 0, %s96
      %s113 = sphi 0, %s97
    $region4: #{tpu_custom_call.1} parent=1 // loop_header_branch
      %18 = sbr.rel (%p16) target = $region8
    $region5: #{tpu_custom_call.1} parent=1 // loop_body
      %s20 = ssub.s32 %s15, 1
      %s21 = ssub.s32 %s15, 2
      %s22 = sadd.s32 %s15, 1
      %s24 = sadd.s32 %s23, 1
      %p27 = scmp.eq.s32.totalorder %s15, 1
      %p28 = scmp.ne.s32.totalorder %s23, %s25
      %p29 = scmp.eq.s32.totalorder %s15, 0
      %p30 = por %p28, %p29
      %p31 = scmp.ne.s32.totalorder %s23, %s25
      %p32 = scmp.eq.s32.totalorder %s20, 1
      %p33 = por %p31, %p32
      %p34 = scmp.ne.s32.totalorder %s25, %s26
      %p35 = scmp.eq.s32.totalorder %s20, 0
      %p36 = por %p34, %p35
      %p37 = scmp.ne.s32.totalorder %s25, %s26
      %p38 = scmp.eq.s32.totalorder %s21, 1
      %p39 = por %p37, %p38
      %p41 = scmp.ne.s32.totalorder %s26, %s40
      %p42 = scmp.eq.s32.totalorder %s21, 0
      %p43 = por %p41, %p42
      %s44 = ssub.s32 %s15, %s22
      %p45 = scmp.eq.s32.totalorder %s44, 0
      %s47 = sadd.s32 %s46, 1
      %s48 = scalar_select %p45, %s46, %s47
      %p51 = pneg %p45
      %p52 = scmp.eq.s32.totalorder %s15, 1
      %p53 = por %p51, %p52
      %p54 = scmp.ne.s32.totalorder %s46, %s49
      %p55 = scmp.eq.s32.totalorder %s15, 0
      %p56 = por %p54, %p55
      %p57 = scmp.ne.s32.totalorder %s46, %s49
      %p58 = scmp.eq.s32.totalorder %s20, 1
      %p59 = por %p57, %p58
      %p60 = scmp.ne.s32.totalorder %s49, %s50
      %p61 = scmp.eq.s32.totalorder %s20, 0
      %p62 = por %p60, %p61
      %p63 = scmp.ne.s32.totalorder %s49, %s50
      %p64 = scmp.eq.s32.totalorder %s21, 1
      %p65 = por %p63, %p64
      %p67 = scmp.ne.s32.totalorder %s50, %s66
      %p68 = scmp.eq.s32.totalorder %s21, 0
      %p69 = por %p67, %p68
      %s71 = sadd.s32 %s70, 1
      %p74 = scmp.eq.s32.totalorder %s15, 1
      %p75 = scmp.ne.s32.totalorder %s70, %s72
      %p76 = scmp.eq.s32.totalorder %s15, 0
      %p77 = por %p75, %p76
      %p78 = scmp.ne.s32.totalorder %s70, %s72
      %p79 = scmp.eq.s32.totalorder %s20, 1
      %p80 = por %p78, %p79
      %p81 = scmp.ne.s32.totalorder %s72, %s73
      %p82 = scmp.eq.s32.totalorder %s20, 0
      %p83 = por %p81, %p82
      %p84 = scmp.ne.s32.totalorder %s72, %s73
      %p85 = scmp.eq.s32.totalorder %s21, 1
      %p86 = por %p84, %p85
      %p88 = scmp.ne.s32.totalorder %s73, %s87
      %p89 = scmp.eq.s32.totalorder %s21, 0
      %p90 = por %p88, %p89
      %s91 = ssub.s32 %s15, %s22
      %p92 = scmp.eq.s32.totalorder %s91, 0
      %s94 = sadd.s32 %s93, 1
      %s95 = scalar_select %p92, %s93, %s94
      %p98 = pneg %p92
      %p99 = scmp.eq.s32.totalorder %s15, 1
      %p100 = por %p98, %p99
      %p101 = scmp.ne.s32.totalorder %s93, %s96
      %p102 = scmp.eq.s32.totalorder %s15, 0
      %p103 = por %p101, %p102
      %p104 = scmp.ne.s32.totalorder %s93, %s96
      %p105 = scmp.eq.s32.totalorder %s20, 1
      %p106 = por %p104, %p105
      %p107 = scmp.ne.s32.totalorder %s96, %s97
      %p108 = scmp.eq.s32.totalorder %s20, 0
      %p109 = por %p107, %p108
      %p110 = scmp.ne.s32.totalorder %s96, %s97
      %p111 = scmp.eq.s32.totalorder %s21, 1
      %p112 = por %p110, %p111
      %p114 = scmp.ne.s32.totalorder %s97, %s113
      %p115 = scmp.eq.s32.totalorder %s21, 0
      %p116 = por %p114, %p115
      %p117 = scmp.le.s32.totalorder 1, %s15
      %p118 = scmp.lt.s32.totalorder %s15, 3
      %p119 = pnand %p117, %p118
      %p120 = pneg %p119
      // Predicated region
      $region9: #{tpu_custom_call.1} parent=5 // pred_check
        _
      $region10: #{tpu_custom_call.1} parent=5 // pred_check_branch
        %122 = sbr.rel (%p119) target = $region12
      $region11: #{tpu_custom_call.1} parent=5 // pred_region
        %s123 = ssub.s32 %s15, 1
        // Predicated region
        $region13: #{tpu_custom_call.1} parent=11 // pred_check
          %p124 = pneg %p36
        $region14: #{tpu_custom_call.1} parent=11 // pred_check_branch
          %126 = sbr.rel (%p124) target = $region16
        $region15: #{tpu_custom_call.1} parent=11 // pred_region
          _
        $region16: #{tpu_custom_call.1} parent=11 // pred_fallthru
          _
        // Predicated region
        $region17: #{tpu_custom_call.1} parent=11 // pred_check
          %p127 = pneg %p83
        $region18: #{tpu_custom_call.1} parent=11 // pred_check_branch
          %129 = sbr.rel (%p127) target = $region20
        $region19: #{tpu_custom_call.1} parent=11 // pred_region
          _
        $region20: #{tpu_custom_call.1} parent=11 // pred_fallthru
          _
      $region12: #{tpu_custom_call.1} parent=5 // pred_fallthru
        _
      %p130 = scmp.lt.s32.totalorder %s15, 2
      // Predicated region
      $region21: #{tpu_custom_call.1} parent=5 // pred_check
        %p131 = pneg %p130
      $region22: #{tpu_custom_call.1} parent=5 // pred_check_branch
        %133 = sbr.rel (%p131) target = $region24
      $region23: #{tpu_custom_call.1} parent=5 // pred_region
        // Predicated region
        $region25: #{tpu_custom_call.1} parent=23 // pred_check
          %p134 = pneg %p56
        $region26: #{tpu_custom_call.1} parent=23 // pred_check_branch
          %136 = sbr.rel (%p134) target = $region28
        $region27: #{tpu_custom_call.1} parent=23 // pred_region
          %s137 = sand.u32 %s46, 1
          %s138 = scalar_lea.sflag [#allocation3], %s137
          %s139 = sand.u32 %s46, 1
          %s140 = smul.addr %s139, 32
          %s141 = scalar_lea.vmem [#allocation2], %s140
          %143 = vsyncadd %s138, 0
          %s144 = smul.addr %s15, 8
          %s145 = smul.addr %s144, 4
          %s146 = scalar_lea.hbm %s1, %s145
          %s147 = sshll.u32 %s146, 4
          %s148 = int_to_ptr.hbm [resolvable:$true] %s147
          %s149 = sshll.u32 %s141, 4
          %s150 = int_to_ptr.vmem [resolvable:$true] %s149
          %155 = dma.hbm_to_vmem [thread:$0]  %s148, 512, %s150, %s138, 64, 64, 4
        $region28: #{tpu_custom_call.1} parent=23 // pred_fallthru
          _
      $region24: #{tpu_custom_call.1} parent=5 // pred_fallthru
        _
      %p156 = scmp.le.s32.totalorder 1, %s15
      %p157 = scmp.lt.s32.totalorder %s15, 3
      %p158 = pnand %p156, %p157
      %p159 = pneg %p158
      // Predicated region
      $region29: #{tpu_custom_call.1} parent=5 // pred_check
        _
      $region30: #{tpu_custom_call.1} parent=5 // pred_check_branch
        %161 = sbr.rel (%p158) target = $region32
      $region31: #{tpu_custom_call.1} parent=5 // pred_region
        %s162 = ssub.s32 %s15, 1
        %s163 = sand.u32 %s49, 1
        %s164 = scalar_lea.sflag [#allocation3], %s163
        %s165 = sand.u32 %s49, 1
        %s166 = smul.addr %s165, 32
        %s167 = scalar_lea.vmem [#allocation2], %s166
        // Predicated region
        $region33: #{tpu_custom_call.1} parent=31 // pred_check
          %p168 = pneg %p62
        $region34: #{tpu_custom_call.1} parent=31 // pred_check_branch
          %170 = sbr.rel (%p168) target = $region36
        $region35: #{tpu_custom_call.1} parent=31 // pred_region
          %172 = dma.done %s164, 512
        $region36: #{tpu_custom_call.1} parent=31 // pred_fallthru
          _
        %p173 = pneg %p36
        %p174 = pneg %p33
        %s175 = sand.u32 %s49, 1
        %s176 = scalar_lea.sflag [#allocation3], %s175
        %s177 = sand.u32 %s49, 1
        %s178 = smul.addr %s177, 32
        %s179 = scalar_lea.vmem [#allocation2], %s178
        %p180 = pneg %p62
        %p181 = pneg %p59
        %p182 = pneg %p83
        %p183 = pneg %p80
        %p184 = pneg %p109
        %p185 = pneg %p106
        %s186 = sand.u32 %s96, 1
        %s187 = scalar_lea.sflag [#allocation4], %s186
        %s188 = sand.u32 %s96, 1
        %s189 = smul.addr %s188, 8
        %s190 = scalar_lea.vmem [#allocation5], %s189
        %v192 = vld [vmem:[%s0] sm:$0xf]
        %v193 = vld [vmem:[%s167] sm:$0xf]
        %v194 = vld [vmem:[%s167 + $0x4] sm:$0xf]
        %v195 = vld [vmem:[%s167 + $0x8] sm:$0xf]
        %v196 = vld [vmem:[%s167 + $0xc] sm:$0xf]
        %v197 = vld [vmem:[%s167 + $0x10] sm:$0xf]
        %v198 = vld [vmem:[%s167 + $0x14] sm:$0xf]
        %v199 = vld [vmem:[%s167 + $0x18] sm:$0xf]
        %v200 = vld [vmem:[%s167 + $0x1c] sm:$0xf]
        %v209 = vunpack.c.l.b16 %v193
        %v210 = vunpack.c.l.b16 %v194
        %v211 = vunpack.c.l.b16 %v195
        %v212 = vunpack.c.l.b16 %v196
        %v213 = vunpack.c.l.b16 %v197
        %v214 = vunpack.c.l.b16 %v198
        %v215 = vunpack.c.l.b16 %v199
        %v216 = vunpack.c.l.b16 %v200
        %v217 = vpack.c.b16 %v210, %v209
        %v218 = vpack.c.b16 %v212, %v211
        %v219 = vpack.c.b16 %v214, %v213
        %v220 = vpack.c.b16 %v216, %v215
        %vm225 = vcmask 523264
        %v227 = vsel %vm225, %v192, 0
        %229 = vmatpush.bf16.msra.mxu0 0
        %230 = vmatpush.bf16.msra.mxu0 0
        %231 = vmatpush.bf16.msra.mxu0 0
        %232 = vmatpush.bf16.msra.mxu0 0
        %233 = vmatpush.bf16.msra.mxu0 %v220
        %234 = vmatpush.bf16.msra.mxu0 %v219
        %235 = vmatpush.bf16.msra.mxu0 %v218
        %236 = vmatpush.bf16.msra.mxu0 %v217
        %237 = vmatmul.bf16.gmra.mxu0 %v227
        %v238 = vpop.f32.mrf.mxu0
        %v239 = vadd.f32 0.0, %v238
        %v240 = vpop.f32.mrf.mxu0
        %241 = vdwg.mxu0
        %v242 = vsel %vm225, %v239, 0.0
        %243 = vadd.xlane.f32.xlu0 %v242
        %v244 = vpop.xlane.xlu0 %243
        %v245 = vmul.f32 %v244, 0.015625
        %v246 = vmul.f32 %v239, %v239
        %v247 = vsel %vm225, %v246, 0.0
        %248 = vadd.xlane.f32.xlu0 %v247
        %v249 = vpop.xlane.xlu0 %248
        %v250 = vmul.f32 %v249, 0.015625
        %v251 = vmul.f32 %v245, %v245
        %v252 = vsub.f32 %v250, %v251
        %v253 = vadd.f32 %v252, 1e-05
        %v254 = vrsqrt.pop %v253
        %v255 = vmul.f32 %v254, %v253
        %v256 = vmul.f32 %v255, %v254
        %v257 = vmul.f32 0.5, %v256
        %v258 = vsub.f32 1.5, %v257
        %v259 = vmul.f32 %v254, %v258
        %vm260 = vweird.f32 %v253
        %vm261 = vweird.f32 %v254
        %vm262 = vmor %vm260, %vm261
        %v263 = vsel %vm262, %v254, %v259
        %v264 = vld [vmem:[%s2] sm:$0xff]
        %v265 = vsub.f32 %v239, %v245
        %v266 = vmul.f32 %v263, %v264
        %268 = vset.pattern.permute.xlu0 0
        %269 = vperm.xlu0 %268, %v266
        %v270 = vpop.permute.xlu0 %269
        %v272 = vmul.f32 %v265, %v270
        %274 = vset.pattern.permute.xlu0 1
        %275 = vperm.xlu0 %274, %v264
        %v276 = vpop.permute.xlu0 %275
        %v278 = vadd.f32 %v272, %v276
        %v279 = vmax.f32 %v278, 0.0
        %280 = vst.msk [vmem:[%s190] sm:$0xff] %vm225, %v279
        %s281 = sand.u32 %s96, 1
        %s282 = scalar_lea.sflag [#allocation4], %s281
        %s283 = sand.u32 %s96, 1
        %s284 = smul.addr %s283, 8
        %s285 = scalar_lea.vmem [#allocation5], %s284
        // Predicated region
        $region37: #{tpu_custom_call.1} parent=31 // pred_check
          %p286 = pneg %p106
        $region38: #{tpu_custom_call.1} parent=31 // pred_check_branch
          %288 = sbr.rel (%p286) target = $region40
        $region39: #{tpu_custom_call.1} parent=31 // pred_region
          %290 = vsyncadd %s282, 0
          %s291 = smul.addr %s20, 8
          %s292 = scalar_lea.hbm %s3, %s291
          %s294 = sshll.u32 %s285, 4
          %s295 = int_to_ptr.vmem [resolvable:$true] %s294
          %s296 = sshll.u32 %s292, 4
          %s297 = int_to_ptr.hbm [resolvable:$true] %s296
          %299 = dma.vmem_to_hbm [thread:$0]  %s295, 128, %s297, %s282
        $region40: #{tpu_custom_call.1} parent=31 // pred_fallthru
          _
      $region32: #{tpu_custom_call.1} parent=5 // pred_fallthru
        _
      %p300 = scmp.le.s32.totalorder 2, %s15
      // Predicated region
      $region41: #{tpu_custom_call.1} parent=5 // pred_check
        %p301 = pneg %p300
      $region42: #{tpu_custom_call.1} parent=5 // pred_check_branch
        %303 = sbr.rel (%p301) target = $region44
      $region43: #{tpu_custom_call.1} parent=5 // pred_region
        %s304 = ssub.s32 %s15, 2
        // Predicated region
        $region45: #{tpu_custom_call.1} parent=43 // pred_check
          %p305 = pneg %p112
        $region46: #{tpu_custom_call.1} parent=43 // pred_check_branch
          %307 = sbr.rel (%p305) target = $region48
        $region47: #{tpu_custom_call.1} parent=43 // pred_region
          %s308 = sand.u32 %s97, 1
          %s309 = scalar_lea.sflag [#allocation4], %s308
          %s310 = sand.u32 %s97, 1
          %s311 = smul.addr %s310, 8
          %s312 = scalar_lea.vmem [#allocation5], %s311
          %314 = dma.done %s309, 128
        $region48: #{tpu_custom_call.1} parent=43 // pred_fallthru
          _
      $region44: #{tpu_custom_call.1} parent=5 // pred_fallthru
        _
    $region6: #{tpu_custom_call.1} parent=1 // loop_footer
      %s19 = sadd.s32 1, %s15
    $region7: #{tpu_custom_call.1} parent=1 // loop_footer_branch
      %14 = sbr.rel target = $region3
    $region8: #{tpu_custom_call.1} parent=1 // loop_exit
      _
    %315 = vsyncpa [#allocation3], 1
    %s316 = scalar_lea.sflag [#allocation3], 1
    %317 = vsyncpa %s316, 1
    %318 = vsyncpa [#allocation4], 1
    %s319 = scalar_lea.sflag [#allocation4], 1
    %320 = vsyncpa %s319, 1

</llo_original>
